<compile_context>
chip_gen: v6e
topology: v6e:2x2x1
jax: 0.10.0
libtpu: 0.0.40
codegen_flags: <defaults>
</compile_context>

<pallas_src>
import jax
import jax.numpy as jnp
from jax.experimental import pallas as pl
from jax.experimental.pallas import tpu as pltpu


def _round_up(x, m):
    return ((x + m - 1) // m) * m


def _pick_batch_tile(B):
    """Batch tile: big enough to amortize per-grid-step overhead, but keep
    grid >= 2 for mid/large B so v7x's two TensorCores both get work."""
    if B <= 8:
        return B                                # single (possibly ragged) tile
    if B <= 2048:
        return _round_up(pl.cdiv(B, 2), 8)      # exactly ~2 tiles
    return 1024                                  # large B: 1024-row tiles


def mlp_kernel(x_ref,
               w1_ref, b1_ref,
               w2_ref, b2_ref,
               w3_ref, b3_ref,
               w4_ref, b4_ref,
               o_ref):
    # Matmuls: bf16 operands on the MXU, f32 accumulation.
    # Bias-add / ReLU in f32, then cast to bf16 immediately so large
    # intermediates live (and spill) as bf16.
    h = jnp.dot(x_ref[...].astype(jnp.bfloat16), w1_ref[...],
                preferred_element_type=jnp.float32)
    h = jnp.maximum(h + b1_ref[...], 0.0).astype(jnp.bfloat16)

    h = jnp.dot(h, w2_ref[...], preferred_element_type=jnp.float32)
    h = jnp.maximum(h + b2_ref[...], 0.0).astype(jnp.bfloat16)

    h = jnp.dot(h, w3_ref[...], preferred_element_type=jnp.float32)
    h = jnp.maximum(h + b3_ref[...], 0.0).astype(jnp.bfloat16)

    o = jnp.dot(h, w4_ref[...], preferred_element_type=jnp.float32) + b4_ref[...]
    o_ref[...] = o.astype(o_ref.dtype)


def simple_net_forward(x, params, n_outputs):
    """x: (B, n_features) f32. params: lane-padded bf16 weights / f32 biases."""
    B, nf = x.shape
    d1 = params["w1"].shape[1]
    d2 = params["w2"].shape[1]
    d3 = params["w3"].shape[1]
    no_pad = params["w4"].shape[1]               # lane-padded output width (>= 128)

    TB = _pick_batch_tile(B)
    grid = (pl.cdiv(B, TB),)                     # ragged last tile handled by Pallas

    # Weights/biases: full-array blocks, constant index_map -> DMA'd once,
    # VMEM-resident across all batch tiles.
    def resident(arr):
        return pl.BlockSpec(arr.shape, lambda i: (0, 0))

    in_specs = [pl.BlockSpec((TB, nf), lambda i: (i, 0))]
    for k in (1, 2, 3, 4):
        in_specs.append(resident(params[f"w{k}"]))
        in_specs.append(resident(params[f"b{k}"]))

    flops = 2 * B * (nf * d1 + d1 * d2 + d2 * d3 + d3 * no_pad)
    bytes_accessed = (
        B * nf * 4                                                      # x (f32)
        + sum(params[f"w{k}"].size * 2 + params[f"b{k}"].size * 4
              for k in (1, 2, 3, 4))                                    # weights/biases
        + B * no_pad * 4                                                # output (f32)
    )
    cost = pl.CostEstimate(flops=flops, transcendentals=0,
                           bytes_accessed=bytes_accessed)

    out = pl.pallas_call(
        mlp_kernel,
        out_shape=jax.ShapeDtypeStruct((B, no_pad), jnp.float32),
        grid=grid,
        in_specs=in_specs,
        out_specs=pl.BlockSpec((TB, no_pad), lambda i: (i, 0)),
        compiler_params=pltpu.CompilerParams(
            dimension_semantics=("parallel",)),
        cost_estimate=cost,
    )(x,
      params["w1"], params["b1"],
      params["w2"], params["b2"],
      params["w3"], params["b3"],
      params["w4"], params["b4"])

    # Padded lanes are exactly zero (zero-padded w4/b4); slice back to the
    # module's output width.  A downstream consumer could instead fuse this
    # column slice into its first op and take `out` directly.
    return out[:, :n_outputs]


def init_params(key, n_features, n_outputs):
    """torch.nn.Linear-style init (U[-1/sqrt(fan_in), 1/sqrt(fan_in)]).

    Weights are stored transposed (in_features, out_features), zero-padded to
    lane-multiple widths, and cast to bf16.  Biases stay f32 (padded, shape
    (1, out_pad)).  Unpadded f32 copies are kept for the reference check.
    """
    dims = [(n_features, 500), (500, 250), (250, 100), (100, n_outputs)]
    params = {}
    keys = jax.random.split(key, 2 * len(dims))
    in_pad = n_features                      # input feature dim left unpadded
    for i, (fan_in, fan_out) in enumerate(dims):
        out_pad = _round_up(fan_out, 128)
        bound = 1.0 / (fan_in ** 0.5)
        w = jax.random.uniform(keys[2 * i], (fan_in, fan_out),
                               minval=-bound, maxval=bound, dtype=jnp.float32)
        b = jax.random.uniform(keys[2 * i + 1], (fan_out,),
                               minval=-bound, maxval=bound, dtype=jnp.float32)
        w_pad = jnp.zeros((in_pad, out_pad), jnp.float32)
        w_pad = w_pad.at[:fan_in, :fan_out].set(w)
        b_pad = jnp.zeros((1, out_pad), jnp.float32).at[0, :fan_out].set(b)
        params[f"w{i+1}"] = w_pad.astype(jnp.bfloat16)
        params[f"b{i+1}"] = b_pad
        params[f"w{i+1}_f32"] = w
        params[f"b{i+1}_f32"] = b
        in_pad = out_pad
    return params


def reference_forward_exact(x, params, n_outputs):
    """Same numerical recipe as the kernel: bf16 operands, f32 accumulate,
    ReLU result cast to bf16 before the next matmul."""
    h = x.astype(jnp.bfloat16)
    for k in (1, 2, 3):
        h = jnp.dot(h, params[f"w{k}"],
                    preferred_element_type=jnp.float32) + params[f"b{k}"]
        h = jnp.maximum(h, 0.0).astype(jnp.bfloat16)
    o = jnp.dot(h, params["w4"],
                preferred_element_type=jnp.float32) + params["b4"]
    return o[:, :n_outputs]


def reference_forward_f32(x, params):
    """Original SimpleNet math, unpadded f32 weights (loose-tolerance check)."""
    h = jnp.maximum(x @ params["w1_f32"] + params["b1_f32"], 0.0)
    h = jnp.maximum(h @ params["w2_f32"] + params["b2_f32"], 0.0)
    h = jnp.maximum(h @ params["w3_f32"] + params["b3_f32"], 0.0)
    return h @ params["w4_f32"] + params["b4_f32"]


if __name__ == "__main__":
    n_features, n_outputs = 32, 10
    batch = 8

    key = jax.random.PRNGKey(0)
    k_x, k_p = jax.random.split(key)
    x = jax.random.normal(k_x, (batch, n_features), dtype=jnp.float32)
    params = init_params(k_p, n_features, n_outputs)

    out = simple_net_forward(x, params, n_outputs)
    out = jax.block_until_ready(out)
    assert out.shape == (batch, n_outputs)

    # Tight check: same bf16-operand / f32-accumulate recipe as the kernel.
    ref = reference_forward_exact(x, params, n_outputs)
    assert jnp.allclose(out, ref, atol=1e-3, rtol=1e-3), \
        float(jnp.max(jnp.abs(out - ref)))

    # Loose sanity check vs the original f32 SimpleNet math (bf16 rounding).
    ref32 = reference_forward_f32(x, params)
    assert jnp.allclose(out, ref32, atol=1e-1, rtol=1e-1)

    print("KERNEL_OK")
</pallas_src>

<mosaic_0001>
module attributes {stable_mosaic.version = 11 : i64} {
  func.func @mlp_kernel(%arg0: i32, %arg1: memref<8x32xf32, #tpu.memory_space<vmem>>, %arg2: memref<32x512xbf16, #tpu.memory_space<vmem>>, %arg3: memref<1x512xf32, #tpu.memory_space<vmem>>, %arg4: memref<512x256xbf16, #tpu.memory_space<vmem>>, %arg5: memref<1x256xf32, #tpu.memory_space<vmem>>, %arg6: memref<256x128xbf16, #tpu.memory_space<vmem>>, %arg7: memref<1x128xf32, #tpu.memory_space<vmem>>, %arg8: memref<128x128xbf16, #tpu.memory_space<vmem>>, %arg9: memref<1x128xf32, #tpu.memory_space<vmem>>, %arg10: memref<8x128xf32, #tpu.memory_space<vmem>>) attributes {dimension_semantics = [#tpu.dimension_semantics<parallel>], iteration_bounds = array<i64: 1>, scalar_prefetch = 0 : i64, scratch_operands = 0 : i64, tpu.core_type = #tpu.core_type<tc>, window_params = [{transform_indices = @transform_0, window_bounds = array<i64: 8, 32>}, {pipeline_mode = #tpu.pipeline_mode<synchronous>, transform_indices = @transform_1, window_bounds = array<i64: 32, 512>}, {pipeline_mode = #tpu.pipeline_mode<synchronous>, transform_indices = @transform_2, window_bounds = array<i64: 1, 512>}, {pipeline_mode = #tpu.pipeline_mode<synchronous>, transform_indices = @transform_3, window_bounds = array<i64: 512, 256>}, {pipeline_mode = #tpu.pipeline_mode<synchronous>, transform_indices = @transform_4, window_bounds = array<i64: 1, 256>}, {pipeline_mode = #tpu.pipeline_mode<synchronous>, transform_indices = @transform_5, window_bounds = array<i64: 256, 128>}, {pipeline_mode = #tpu.pipeline_mode<synchronous>, transform_indices = @transform_6, window_bounds = array<i64: 1, 128>}, {pipeline_mode = #tpu.pipeline_mode<synchronous>, transform_indices = @transform_7, window_bounds = array<i64: 128, 128>}, {pipeline_mode = #tpu.pipeline_mode<synchronous>, transform_indices = @transform_8, window_bounds = array<i64: 1, 128>}, {transform_indices = @transform_9, window_bounds = array<i64: 8, 128>}]} {
    %c0 = arith.constant 0 : index
    %c0_0 = arith.constant 0 : index
    %0 = vector.load %arg1[%c0, %c0_0] : memref<8x32xf32, #tpu.memory_space<vmem>>, vector<8x32xf32>
    %1 = arith.truncf %0 : vector<8x32xf32> to vector<8x32xbf16>
    %c0_1 = arith.constant 0 : index
    %c0_2 = arith.constant 0 : index
    %2 = vector.load %arg2[%c0_1, %c0_2] : memref<32x512xbf16, #tpu.memory_space<vmem>>, vector<32x512xbf16>
    %cst = arith.constant dense<0.000000e+00> : vector<8x512xf32>
    %3 = tpu.matmul %1, %2, %cst {dimension_numbers = #tpu.dot_dimension_numbers<[1], [0], [0], [1], [0, 0, 1, 1], [], []>} : vector<8x32xbf16>, vector<32x512xbf16>, vector<8x512xf32> -> vector<8x512xf32>
    %c0_3 = arith.constant 0 : index
    %c0_4 = arith.constant 0 : index
    %4 = vector.load %arg3[%c0_3, %c0_4] : memref<1x512xf32, #tpu.memory_space<vmem>>, vector<1x512xf32>
    %5 = vector.broadcast %4 : vector<1x512xf32> to vector<8x512xf32>
    %6 = arith.addf %3, %5 : vector<8x512xf32>
    %cst_5 = arith.constant 0.000000e+00 : f32
    %7 = vector.broadcast %cst_5 : f32 to vector<8x512xf32>
    %8 = arith.maximumf %6, %7 : vector<8x512xf32>
    %9 = arith.truncf %8 : vector<8x512xf32> to vector<8x512xbf16>
    %c0_6 = arith.constant 0 : index
    %c0_7 = arith.constant 0 : index
    %10 = vector.load %arg4[%c0_6, %c0_7] : memref<512x256xbf16, #tpu.memory_space<vmem>>, vector<512x256xbf16>
    %cst_8 = arith.constant dense<0.000000e+00> : vector<8x256xf32>
    %11 = tpu.matmul %9, %10, %cst_8 {dimension_numbers = #tpu.dot_dimension_numbers<[1], [0], [0], [1], [0, 0, 1, 1], [], []>} : vector<8x512xbf16>, vector<512x256xbf16>, vector<8x256xf32> -> vector<8x256xf32>
    %c0_9 = arith.constant 0 : index
    %c0_10 = arith.constant 0 : index
    %12 = vector.load %arg5[%c0_9, %c0_10] : memref<1x256xf32, #tpu.memory_space<vmem>>, vector<1x256xf32>
    %13 = vector.broadcast %12 : vector<1x256xf32> to vector<8x256xf32>
    %14 = arith.addf %11, %13 : vector<8x256xf32>
    %cst_11 = arith.constant 0.000000e+00 : f32
    %15 = vector.broadcast %cst_11 : f32 to vector<8x256xf32>
    %16 = arith.maximumf %14, %15 : vector<8x256xf32>
    %17 = arith.truncf %16 : vector<8x256xf32> to vector<8x256xbf16>
    %c0_12 = arith.constant 0 : index
    %c0_13 = arith.constant 0 : index
    %18 = vector.load %arg6[%c0_12, %c0_13] : memref<256x128xbf16, #tpu.memory_space<vmem>>, vector<256x128xbf16>
    %cst_14 = arith.constant dense<0.000000e+00> : vector<8x128xf32>
    %19 = tpu.matmul %17, %18, %cst_14 {dimension_numbers = #tpu.dot_dimension_numbers<[1], [0], [0], [1], [0, 0, 1, 1], [], []>} : vector<8x256xbf16>, vector<256x128xbf16>, vector<8x128xf32> -> vector<8x128xf32>
    %c0_15 = arith.constant 0 : index
    %c0_16 = arith.constant 0 : index
    %20 = vector.load %arg7[%c0_15, %c0_16] : memref<1x128xf32, #tpu.memory_space<vmem>>, vector<1x128xf32>
    %21 = vector.broadcast %20 : vector<1x128xf32> to vector<8x128xf32>
    %22 = arith.addf %19, %21 : vector<8x128xf32>
    %cst_17 = arith.constant 0.000000e+00 : f32
    %23 = vector.broadcast %cst_17 : f32 to vector<8x128xf32>
    %24 = arith.maximumf %22, %23 : vector<8x128xf32>
    %25 = arith.truncf %24 : vector<8x128xf32> to vector<8x128xbf16>
    %c0_18 = arith.constant 0 : index
    %c0_19 = arith.constant 0 : index
    %26 = vector.load %arg8[%c0_18, %c0_19] : memref<128x128xbf16, #tpu.memory_space<vmem>>, vector<128x128xbf16>
    %cst_20 = arith.constant dense<0.000000e+00> : vector<8x128xf32>
    %27 = tpu.matmul %25, %26, %cst_20 {dimension_numbers = #tpu.dot_dimension_numbers<[1], [0], [0], [1], [0, 0, 1, 1], [], []>} : vector<8x128xbf16>, vector<128x128xbf16>, vector<8x128xf32> -> vector<8x128xf32>
    %c0_21 = arith.constant 0 : index
    %c0_22 = arith.constant 0 : index
    %28 = vector.load %arg9[%c0_21, %c0_22] : memref<1x128xf32, #tpu.memory_space<vmem>>, vector<1x128xf32>
    %29 = vector.broadcast %28 : vector<1x128xf32> to vector<8x128xf32>
    %30 = arith.addf %27, %29 : vector<8x128xf32>
    %c0_23 = arith.constant 0 : index
    %c0_24 = arith.constant 0 : index
    %31 = vector.load %arg10[%c0_23, %c0_24] : memref<8x128xf32, #tpu.memory_space<vmem>>, vector<8x128xf32>
    tpu.vector_store %arg10[%c0_23, %c0_24], %30 {strides = array<i32>} : memref<8x128xf32, #tpu.memory_space<vmem>>, vector<8x128xf32>,
    return
  }
  func.func @transform_0(%arg0: i32) -> (i32, i32) {
    %c0_i32 = arith.constant 0 : i32
    %c0_i32_0 = arith.constant 0 : i32
    return %arg0, %c0_i32 : i32, i32
  }
  func.func @transform_1(%arg0: i32) -> (i32, i32) {
    %c0_i32 = arith.constant 0 : i32
    %c0_i32_0 = arith.constant 0 : i32
    %c0_i32_1 = arith.constant 0 : i32
    return %c0_i32, %c0_i32_0 : i32, i32
  }
  func.func @transform_2(%arg0: i32) -> (i32, i32) {
    %c0_i32 = arith.constant 0 : i32
    %c0_i32_0 = arith.constant 0 : i32
    %c0_i32_1 = arith.constant 0 : i32
    return %c0_i32, %c0_i32_0 : i32, i32
  }
  func.func @transform_3(%arg0: i32) -> (i32, i32) {
    %c0_i32 = arith.constant 0 : i32
    %c0_i32_0 = arith.constant 0 : i32
    %c0_i32_1 = arith.constant 0 : i32
    return %c0_i32, %c0_i32_0 : i32, i32
  }
  func.func @transform_4(%arg0: i32) -> (i32, i32) {
    %c0_i32 = arith.constant 0 : i32
    %c0_i32_0 = arith.constant 0 : i32
    %c0_i32_1 = arith.constant 0 : i32
    return %c0_i32, %c0_i32_0 : i32, i32
  }
  func.func @transform_5(%arg0: i32) -> (i32, i32) {
    %c0_i32 = arith.constant 0 : i32
    %c0_i32_0 = arith.constant 0 : i32
    %c0_i32_1 = arith.constant 0 : i32
    return %c0_i32, %c0_i32_0 : i32, i32
  }
  func.func @transform_6(%arg0: i32) -> (i32, i32) {
    %c0_i32 = arith.constant 0 : i32
    %c0_i32_0 = arith.constant 0 : i32
    %c0_i32_1 = arith.constant 0 : i32
    return %c0_i32, %c0_i32_0 : i32, i32
  }
  func.func @transform_7(%arg0: i32) -> (i32, i32) {
    %c0_i32 = arith.constant 0 : i32
    %c0_i32_0 = arith.constant 0 : i32
    %c0_i32_1 = arith.constant 0 : i32
    return %c0_i32, %c0_i32_0 : i32, i32
  }
  func.func @transform_8(%arg0: i32) -> (i32, i32) {
    %c0_i32 = arith.constant 0 : i32
    %c0_i32_0 = arith.constant 0 : i32
    %c0_i32_1 = arith.constant 0 : i32
    return %c0_i32, %c0_i32_0 : i32, i32
  }
  func.func @transform_9(%arg0: i32) -> (i32, i32) {
    %c0_i32 = arith.constant 0 : i32
    %c0_i32_0 = arith.constant 0 : i32
    return %arg0, %c0_i32 : i32, i32
  }
}

</mosaic_0001>

<llo_original>
// kernel: tpu_custom_call.1
$region0: #{tpu_custom_call.1}
  #allocation0 [shape = 'u32[]', space=smem, size = 0x4, offset = 0x4, fixed_abs, tag = 'smem constant byte address 0x4 - core index']
  #allocation1 [shape = 'u32[144,128]{1,0:T(1,128)}', space=vmem, size = 0x12000, scoped, tag = 'internal scratch']
  %s0 = inlined_call_operand.hbm [shape: f32[8,32], index: 0, kind: input, shape index: {}]
  %s1 = inlined_call_operand.hbm [shape: bf16[32,512], index: 1, kind: input, shape index: {}]
  %s2 = inlined_call_operand.hbm [shape: f32[1,512], index: 2, kind: input, shape index: {}]
  %s3 = inlined_call_operand.hbm [shape: bf16[512,256], index: 3, kind: input, shape index: {}]
  %s4 = inlined_call_operand.vmem [shape: f32[1,256], index: 4, kind: input, shape index: {}]
  %s5 = inlined_call_operand.hbm [shape: bf16[256,128], index: 5, kind: input, shape index: {}]
  %s6 = inlined_call_operand.vmem [shape: f32[1,128], index: 6, kind: input, shape index: {}]
  %s7 = inlined_call_operand.hbm [shape: bf16[128,128], index: 7, kind: input, shape index: {}]
  %s8 = inlined_call_operand.vmem [shape: f32[1,128], index: 8, kind: input, shape index: {}]
  %s9 = inlined_call_operand.hbm [shape: f32[8,128], index: 9, kind: output, shape index: {}]
  %s10 = sld [smem:[#allocation0]]
  $region70: #{tpu_custom_call.1} parent=0
    _
  %s12 = ssub.s32 1, %s10
  %s13 = scalar_select 0, %s12, %s10
  $region1: #{tpu_custom_call.1} parent=0
    #allocation2 [shape = 'u8[4096]{0}', space=vmem, size = 0x1000, scoped, tag = 'input window, operand 0, single buffered']
    #allocation3 [shape = 's32[1]{0}', space=sflag, size = 0x4, scoped, tag = 'scoped memory for tpu_custom_call.1']
    #allocation4 [shape = 's32[1]{0}', space=sflag, size = 0x4, scoped, tag = 'scoped memory for tpu_custom_call.1']
    #allocation5 [shape = 'u8[32768]{0}', space=vmem, size = 0x8000, scoped, tag = 'input window, operand 1, single buffered']
    #allocation6 [shape = 's32[1]{0}', space=sflag, size = 0x4, scoped, tag = 'scoped memory for tpu_custom_call.1']
    #allocation7 [shape = 'u8[2048]{0}', space=vmem, size = 0x800, scoped, tag = 'input window, operand 2, single buffered']
    #allocation8 [shape = 'u8[262144]{0}', space=vmem, size = 0x40000, scoped, tag = 'input window, operand 3, single buffered']
    #allocation9 [shape = 's32[1]{0}', space=sflag, size = 0x4, scoped, tag = 'scoped memory for tpu_custom_call.1']
    #allocation10 [shape = 'u8[65536]{0}', space=vmem, size = 0x10000, scoped, tag = 'input window, operand 5, single buffered']
    #allocation11 [shape = 'u8[32768]{0}', space=vmem, size = 0x8000, scoped, tag = 'input window, operand 7, single buffered']
    #allocation12 [shape = 's32[1]{0}', space=sflag, size = 0x4, scoped, tag = 'scoped memory for tpu_custom_call.1']
    #allocation13 [shape = 'u8[4096]{0}', space=vmem, size = 0x1000, scoped, tag = 'output window, operand 0, single buffered']
    %14 = vsyncpa [#allocation3], 0
    %15 = vsyncpa [#allocation6], 0
    %16 = vsyncpa [#allocation9], 0
    %17 = vsyncpa [#allocation12], 0
    %18 = vsyncpa [#allocation4], 0
    // Predicated region
    $region2: #{tpu_custom_call.1} parent=1 // pred_check
      _
    $region3: #{tpu_custom_call.1} parent=1 // pred_check_branch
      %20 = sbr.rel (0) target = $region5
    $region4: #{tpu_custom_call.1} parent=1 // pred_region
      %s22 = ssub.s32 128, 128
      %23 = vsyncadd [#allocation3], %s22
      %s25 = sshll.u32 [#allocation2], 4
      %s26 = int_to_ptr.vmem [resolvable:$true] %s25
      %28 = dma.hbm_to_vmem [thread:$0]  %s0, 128, %s26, [#allocation3]
    $region5: #{tpu_custom_call.1} parent=1 // pred_fallthru
      _
    // Predicated region
    $region6: #{tpu_custom_call.1} parent=1 // pred_check
      _
    $region7: #{tpu_custom_call.1} parent=1 // pred_check_branch
      %30 = sbr.rel (0) target = $region9
    $region8: #{tpu_custom_call.1} parent=1 // pred_region
      %s32 = ssub.s32 1024, 1024
      %33 = vsyncadd [#allocation6], %s32
      %s34 = sshll.u32 [#allocation5], 4
      %s35 = int_to_ptr.vmem [resolvable:$true] %s34
      %40 = dma.hbm_to_vmem [thread:$0]  %s1, 1024, %s35, [#allocation6], 256, 256, 16
    $region9: #{tpu_custom_call.1} parent=1 // pred_fallthru
      _
    // Predicated region
    $region10: #{tpu_custom_call.1} parent=1 // pred_check
      _
    $region11: #{tpu_custom_call.1} parent=1 // pred_check_branch
      %42 = sbr.rel (0) target = $region13
    $region12: #{tpu_custom_call.1} parent=1 // pred_region
      %s44 = ssub.s32 64, 64
      %45 = vsyncadd [#allocation6], %s44
      %s47 = sshll.u32 [#allocation7], 4
      %s48 = int_to_ptr.vmem [resolvable:$true] %s47
      %50 = dma.hbm_to_vmem [thread:$0]  %s2, 64, %s48, [#allocation6]
    $region13: #{tpu_custom_call.1} parent=1 // pred_fallthru
      _
    // Predicated region
    $region14: #{tpu_custom_call.1} parent=1 // pred_check
      _
    $region15: #{tpu_custom_call.1} parent=1 // pred_check_branch
      %52 = sbr.rel (0) target = $region17
    $region16: #{tpu_custom_call.1} parent=1 // pred_region
      %s54 = ssub.s32 8192, 8192
      %55 = vsyncadd [#allocation9], %s54
      %s56 = sshll.u32 [#allocation8], 4
      %s57 = int_to_ptr.vmem [resolvable:$true] %s56
      %62 = dma.hbm_to_vmem [thread:$0]  %s3, 8192, %s57, [#allocation9], 128, 128, 8
    $region17: #{tpu_custom_call.1} parent=1 // pred_fallthru
      _
    // Predicated region
    $region18: #{tpu_custom_call.1} parent=1 // pred_check
      _
    $region19: #{tpu_custom_call.1} parent=1 // pred_check_branch
      %64 = sbr.rel (0) target = $region21
    $region20: #{tpu_custom_call.1} parent=1 // pred_region
      _
    $region21: #{tpu_custom_call.1} parent=1 // pred_fallthru
      _
    // Predicated region
    $region22: #{tpu_custom_call.1} parent=1 // pred_check
      _
    $region23: #{tpu_custom_call.1} parent=1 // pred_check_branch
      %66 = sbr.rel (0) target = $region25
    $region24: #{tpu_custom_call.1} parent=1 // pred_region
      %s68 = ssub.s32 2048, 2048
      %69 = vsyncadd [#allocation9], %s68
      %s70 = sshll.u32 [#allocation10], 4
      %s71 = int_to_ptr.vmem [resolvable:$true] %s70
      %76 = dma.hbm_to_vmem [thread:$0]  %s5, 2048, %s71, [#allocation9], 64, 64, 4
    $region25: #{tpu_custom_call.1} parent=1 // pred_fallthru
      _
    // Predicated region
    $region26: #{tpu_custom_call.1} parent=1 // pred_check
      _
    $region27: #{tpu_custom_call.1} parent=1 // pred_check_branch
      %78 = sbr.rel (0) target = $region29
    $region28: #{tpu_custom_call.1} parent=1 // pred_region
      _
    $region29: #{tpu_custom_call.1} parent=1 // pred_fallthru
      _
    // Predicated region
    $region30: #{tpu_custom_call.1} parent=1 // pred_check
      _
    $region31: #{tpu_custom_call.1} parent=1 // pred_check_branch
      %80 = sbr.rel (0) target = $region33
    $region32: #{tpu_custom_call.1} parent=1 // pred_region
      %s82 = ssub.s32 1024, 1024
      %83 = vsyncadd [#allocation12], %s82
      %s84 = sshll.u32 [#allocation11], 4
      %s85 = int_to_ptr.vmem [resolvable:$true] %s84
      %90 = dma.hbm_to_vmem [thread:$0]  %s7, 1024, %s85, [#allocation12], 64, 64, 4
    $region33: #{tpu_custom_call.1} parent=1 // pred_fallthru
      _
    // Predicated region
    $region34: #{tpu_custom_call.1} parent=1 // pred_check
      _
    $region35: #{tpu_custom_call.1} parent=1 // pred_check_branch
      %92 = sbr.rel (0) target = $region37
    $region36: #{tpu_custom_call.1} parent=1 // pred_region
      _
    $region37: #{tpu_custom_call.1} parent=1 // pred_fallthru
      _
    // Predicated region
    $region38: #{tpu_custom_call.1} parent=1 // pred_check
      _
    $region39: #{tpu_custom_call.1} parent=1 // pred_check_branch
      %94 = sbr.rel (0) target = $region41
    $region40: #{tpu_custom_call.1} parent=1 // pred_region
      %95 = dma.done [#allocation3], 128
    $region41: #{tpu_custom_call.1} parent=1 // pred_fallthru
      _
    // Predicated region
    $region42: #{tpu_custom_call.1} parent=1 // pred_check
      _
    $region43: #{tpu_custom_call.1} parent=1 // pred_check_branch
      %97 = sbr.rel (0) target = $region45
    $region44: #{tpu_custom_call.1} parent=1 // pred_region
      %98 = dma.done [#allocation6], 1024
    $region45: #{tpu_custom_call.1} parent=1 // pred_fallthru
      _
    // Predicated region
    $region46: #{tpu_custom_call.1} parent=1 // pred_check
      _
    $region47: #{tpu_custom_call.1} parent=1 // pred_check_branch
      %100 = sbr.rel (0) target = $region49
    $region48: #{tpu_custom_call.1} parent=1 // pred_region
      %101 = dma.done [#allocation6], 64
    $region49: #{tpu_custom_call.1} parent=1 // pred_fallthru
      _
    // Predicated region
    $region50: #{tpu_custom_call.1} parent=1 // pred_check
      _
    $region51: #{tpu_custom_call.1} parent=1 // pred_check_branch
      %103 = sbr.rel (0) target = $region53
    $region52: #{tpu_custom_call.1} parent=1 // pred_region
      %104 = dma.done [#allocation9], 8192
    $region53: #{tpu_custom_call.1} parent=1 // pred_fallthru
      _
    // Predicated region
    $region54: #{tpu_custom_call.1} parent=1 // pred_check
      _
    $region55: #{tpu_custom_call.1} parent=1 // pred_check_branch
      %106 = sbr.rel (0) target = $region57
    $region56: #{tpu_custom_call.1} parent=1 // pred_region
      %107 = dma.done [#allocation9], 2048
    $region57: #{tpu_custom_call.1} parent=1 // pred_fallthru
      _
    // Predicated region
    $region58: #{tpu_custom_call.1} parent=1 // pred_check
      _
    $region59: #{tpu_custom_call.1} parent=1 // pred_check_branch
      %109 = sbr.rel (0) target = $region61
    $region60: #{tpu_custom_call.1} parent=1 // pred_region
      %110 = dma.done [#allocation12], 1024
    $region61: #{tpu_custom_call.1} parent=1 // pred_fallthru
      _
    %v112 = vld [vmem:[#allocation2] sm:$0xff]
    %v113 = vpack.c.bf16 %v112, %v112
    %v114 = vld [vmem:[#allocation5] sm:$0xff]
    %v115 = vld [vmem:[#allocation5 + $0x8] sm:$0xff]
    %v116 = vld [vmem:[#allocation5 + $0x10] sm:$0xff]
    %v117 = vld [vmem:[#allocation5 + $0x18] sm:$0xff]
    %v118 = vld [vmem:[#allocation5 + $0x20] sm:$0xff]
    %v119 = vld [vmem:[#allocation5 + $0x28] sm:$0xff]
    %v120 = vld [vmem:[#allocation5 + $0x30] sm:$0xff]
    %v121 = vld [vmem:[#allocation5 + $0x38] sm:$0xff]
    %v122 = vld [vmem:[#allocation7] sm:$0xf]
    %v124 = vlaneseq
    %v125 = vshrl.u32 %v124, 7
    %v126 = vsub.s32 0, %v125
    %v127 = vrot.slane %v122, %v126
    %v128 = vlaneseq
    %v129 = vshrl.u32 %v128, 7
    %v130 = vsub.s32 1, %v129
    %v131 = vrot.slane %v122, %v130
    %v132 = vlaneseq
    %v133 = vshrl.u32 %v132, 7
    %v134 = vsub.s32 2, %v133
    %v135 = vrot.slane %v122, %v134
    %v136 = vlaneseq
    %v137 = vshrl.u32 %v136, 7
    %v138 = vsub.s32 3, %v137
    %v139 = vrot.slane %v122, %v138
    %v152 = vunpack.c.l.b16 %v114
    %v153 = vunpack.c.h.b16 %v114
    %v154 = vunpack.c.l.b16 %v115
    %v155 = vunpack.c.h.b16 %v115
    %v156 = vunpack.c.l.b16 %v116
    %v157 = vunpack.c.h.b16 %v116
    %v158 = vunpack.c.l.b16 %v117
    %v159 = vunpack.c.h.b16 %v117
    %v160 = vunpack.c.l.b16 %v118
    %v161 = vunpack.c.h.b16 %v118
    %v162 = vunpack.c.l.b16 %v119
    %v163 = vunpack.c.h.b16 %v119
    %v164 = vunpack.c.l.b16 %v120
    %v165 = vunpack.c.h.b16 %v120
    %v166 = vunpack.c.l.b16 %v121
    %v167 = vunpack.c.h.b16 %v121
    %v168 = vpack.c.b16 %v156, %v152
    %v169 = vpack.c.b16 %v157, %v153
    %v170 = vpack.c.b16 %v158, %v154
    %v171 = vpack.c.b16 %v159, %v155
    %v172 = vpack.c.b16 %v164, %v160
    %v173 = vpack.c.b16 %v165, %v161
    %v174 = vpack.c.b16 %v166, %v162
    %v175 = vpack.c.b16 %v167, %v163
    %vm184 = vcmask 261120
    %v186 = vsel %vm184, %v113, 0
    %188 = vmatprep.subr.bf16.mxu0 0
    %189 = vmatpush1.bf16.msra.mxu0 0
    %190 = vmatprep.subr.bf16.mxu0 0
    %191 = vmatpush1.bf16.msra.mxu0 0
    %192 = vmatprep.subr.bf16.mxu0 0
    %193 = vmatpush1.bf16.msra.mxu0 0
    %194 = vmatprep.subr.bf16.mxu0 0
    %195 = vmatpush1.bf16.msra.mxu0 0
    %196 = vmatprep.subr.bf16.mxu0 0
    %197 = vmatpush1.bf16.msra.mxu0 0
    %198 = vmatprep.subr.bf16.mxu0 0
    %199 = vmatpush1.bf16.msra.mxu0 0
    %200 = vmatprep.subr.bf16.mxu0 %v173
    %201 = vmatpush1.bf16.msra.mxu0 %v172
    %202 = vmatprep.subr.bf16.mxu0 %v169
    %203 = vmatpush1.bf16.msra.mxu0 %v168
    %204 = vmatprep.subr.bf16.mxu0 0
    %205 = vmatpush2.bf16.msra.mxu0 0
    %206 = vmatprep.subr.bf16.mxu0 0
    %207 = vmatpush2.bf16.msra.mxu0 0
    %208 = vmatprep.subr.bf16.mxu0 0
    %209 = vmatpush2.bf16.msra.mxu0 0
    %210 = vmatprep.subr.bf16.mxu0 0
    %211 = vmatpush2.bf16.msra.mxu0 0
    %212 = vmatprep.subr.bf16.mxu0 0
    %213 = vmatpush2.bf16.msra.mxu0 0
    %214 = vmatprep.subr.bf16.mxu0 0
    %215 = vmatpush2.bf16.msra.mxu0 0
    %216 = vmatprep.subr.bf16.mxu0 0
    %217 = vmatpush2.bf16.msra.mxu0 0
    %218 = vmatprep.subr.bf16.mxu0 0
    %219 = vmatpush2.bf16.msra.mxu0 0
    %220 = vmatprep.mubr.bf16.mxu0 0
    %221 = vmatmul.mubr.bf16.gmra.mxu0 %v186
    %v222 = vpop.f32.mrf.mxu0
    %v223 = vadd.f32 %v127, %v222
    %v224 = vpop.f32.mrf.mxu0
    %v225 = vadd.f32 %v131, %v224
    %v226 = vpop.f32.mrf.mxu0
    %v227 = vpop.f32.mrf.mxu0
    %228 = vdwg.mxu0
    %229 = vmatprep.subr.bf16.mxu0 0
    %230 = vmatpush1.bf16.msra.mxu0 0
    %231 = vmatprep.subr.bf16.mxu0 0
    %232 = vmatpush1.bf16.msra.mxu0 0
    %233 = vmatprep.subr.bf16.mxu0 0
    %234 = vmatpush1.bf16.msra.mxu0 0
    %235 = vmatprep.subr.bf16.mxu0 0
    %236 = vmatpush1.bf16.msra.mxu0 0
    %237 = vmatprep.subr.bf16.mxu0 0
    %238 = vmatpush1.bf16.msra.mxu0 0
    %239 = vmatprep.subr.bf16.mxu0 0
    %240 = vmatpush1.bf16.msra.mxu0 0
    %241 = vmatprep.subr.bf16.mxu0 %v175
    %242 = vmatpush1.bf16.msra.mxu0 %v174
    %243 = vmatprep.subr.bf16.mxu0 %v171
    %244 = vmatpush1.bf16.msra.mxu0 %v170
    %245 = vmatprep.subr.bf16.mxu0 0
    %246 = vmatpush2.bf16.msra.mxu0 0
    %247 = vmatprep.subr.bf16.mxu0 0
    %248 = vmatpush2.bf16.msra.mxu0 0
    %249 = vmatprep.subr.bf16.mxu0 0
    %250 = vmatpush2.bf16.msra.mxu0 0
    %251 = vmatprep.subr.bf16.mxu0 0
    %252 = vmatpush2.bf16.msra.mxu0 0
    %253 = vmatprep.subr.bf16.mxu0 0
    %254 = vmatpush2.bf16.msra.mxu0 0
    %255 = vmatprep.subr.bf16.mxu0 0
    %256 = vmatpush2.bf16.msra.mxu0 0
    %257 = vmatprep.subr.bf16.mxu0 0
    %258 = vmatpush2.bf16.msra.mxu0 0
    %259 = vmatprep.subr.bf16.mxu0 0
    %260 = vmatpush2.bf16.msra.mxu0 0
    %261 = vmatprep.mubr.bf16.mxu0 0
    %262 = vmatmul.mubr.bf16.gmra.mxu0 %v186
    %v263 = vpop.f32.mrf.mxu0
    %v264 = vadd.f32 %v135, %v263
    %v265 = vpop.f32.mrf.mxu0
    %v266 = vadd.f32 %v139, %v265
    %v267 = vpop.f32.mrf.mxu0
    %v268 = vpop.f32.mrf.mxu0
    %269 = vdwg.mxu0
    %v270 = vmax.f32 %v223, 0.0
    %v271 = vmax.f32 %v225, 0.0
    %v272 = vmax.f32 %v264, 0.0
    %v273 = vmax.f32 %v266, 0.0
    %v274 = vpack.c.bf16 %v270, %v270
    %v275 = vpack.c.bf16 %v271, %v271
    %v276 = vpack.c.bf16 %v272, %v272
    %v277 = vpack.c.bf16 %v273, %v273
    %v278 = vld [vmem:[#allocation8] sm:$0xff]
    %v279 = vld [vmem:[#allocation8 + $0x8] sm:$0xff]
    %v280 = vld [vmem:[#allocation8 + $0x10] sm:$0xff]
    %v281 = vld [vmem:[#allocation8 + $0x18] sm:$0xff]
    %v282 = vld [vmem:[#allocation8 + $0x20] sm:$0xff]
    %v283 = vld [vmem:[#allocation8 + $0x28] sm:$0xff]
    %v284 = vld [vmem:[#allocation8 + $0x30] sm:$0xff]
    %v285 = vld [vmem:[#allocation8 + $0x38] sm:$0xff]
    %v286 = vld [vmem:[#allocation8 + $0x40] sm:$0xff]
    %v287 = vld [vmem:[#allocation8 + $0x48] sm:$0xff]
    %v288 = vld [vmem:[#allocation8 + $0x50] sm:$0xff]
    %v289 = vld [vmem:[#allocation8 + $0x58] sm:$0xff]
    %v290 = vld [vmem:[#allocation8 + $0x60] sm:$0xff]
    %v291 = vld [vmem:[#allocation8 + $0x68] sm:$0xff]
    %v292 = vld [vmem:[#allocation8 + $0x70] sm:$0xff]
    %v293 = vld [vmem:[#allocation8 + $0x78] sm:$0xff]
    %v294 = vld [vmem:[#allocation8 + $0x80] sm:$0xff]
    %v295 = vld [vmem:[#allocation8 + $0x88] sm:$0xff]
    %v296 = vld [vmem:[#allocation8 + $0x90] sm:$0xff]
    %v297 = vld [vmem:[#allocation8 + $0x98] sm:$0xff]
    %v298 = vld [vmem:[#allocation8 + $0xa0] sm:$0xff]
    %v299 = vld [vmem:[#allocation8 + $0xa8] sm:$0xff]
    %v300 = vld [vmem:[#allocation8 + $0xb0] sm:$0xff]
    %v301 = vld [vmem:[#allocation8 + $0xb8] sm:$0xff]
    %v302 = vld [vmem:[#allocation8 + $0xc0] sm:$0xff]
    %v303 = vld [vmem:[#allocation8 + $0xc8] sm:$0xff]
    %v304 = vld [vmem:[#allocation8 + $0xd0] sm:$0xff]
    %v305 = vld [vmem:[#allocation8 + $0xd8] sm:$0xff]
    %v306 = vld [vmem:[#allocation8 + $0xe0] sm:$0xff]
    %v307 = vld [vmem:[#allocation8 + $0xe8] sm:$0xff]
    %v308 = vld [vmem:[#allocation8 + $0xf0] sm:$0xff]
    %v309 = vld [vmem:[#allocation8 + $0xf8] sm:$0xff]
    %v310 = vld [vmem:[#allocation8 + $0x100] sm:$0xff]
    %v311 = vld [vmem:[#allocation8 + $0x108] sm:$0xff]
    %v312 = vld [vmem:[#allocation8 + $0x110] sm:$0xff]
    %v313 = vld [vmem:[#allocation8 + $0x118] sm:$0xff]
    %v314 = vld [vmem:[#allocation8 + $0x120] sm:$0xff]
    %v315 = vld [vmem:[#allocation8 + $0x128] sm:$0xff]
    %v316 = vld [vmem:[#allocation8 + $0x130] sm:$0xff]
    %v317 = vld [vmem:[#allocation8 + $0x138] sm:$0xff]
    %v318 = vld [vmem:[#allocation8 + $0x140] sm:$0xff]
    %v319 = vld [vmem:[#allocation8 + $0x148] sm:$0xff]
    %v320 = vld [vmem:[#allocation8 + $0x150] sm:$0xff]
    %v321 = vld [vmem:[#allocation8 + $0x158] sm:$0xff]
    %v322 = vld [vmem:[#allocation8 + $0x160] sm:$0xff]
    %v323 = vld [vmem:[#allocation8 + $0x168] sm:$0xff]
    %v324 = vld [vmem:[#allocation8 + $0x170] sm:$0xff]
    %v325 = vld [vmem:[#allocation8 + $0x178] sm:$0xff]
    %v326 = vld [vmem:[#allocation8 + $0x180] sm:$0xff]
    %v327 = vld [vmem:[#allocation8 + $0x188] sm:$0xff]
    %v328 = vld [vmem:[#allocation8 + $0x190] sm:$0xff]
    %v329 = vld [vmem:[#allocation8 + $0x198] sm:$0xff]
    %v330 = vld [vmem:[#allocation8 + $0x1a0] sm:$0xff]
    %v331 = vld [vmem:[#allocation8 + $0x1a8] sm:$0xff]
    %v332 = vld [vmem:[#allocation8 + $0x1b0] sm:$0xff]
    %v333 = vld [vmem:[#allocation8 + $0x1b8] sm:$0xff]
    %v334 = vld [vmem:[#allocation8 + $0x1c0] sm:$0xff]
    %v335 = vld [vmem:[#allocation8 + $0x1c8] sm:$0xff]
    %v336 = vld [vmem:[#allocation8 + $0x1d0] sm:$0xff]
    %v337 = vld [vmem:[#allocation8 + $0x1d8] sm:$0xff]
    %v338 = vld [vmem:[#allocation8 + $0x1e0] sm:$0xff]
    %v339 = vld [vmem:[#allocation8 + $0x1e8] sm:$0xff]
    %v340 = vld [vmem:[#allocation8 + $0x1f0] sm:$0xff]
    %v341 = vld [vmem:[#allocation8 + $0x1f8] sm:$0xff]
    %v342 = vld [vmem:[%s4] sm:$0x3]
    %v344 = vlaneseq
    %v345 = vshrl.u32 %v344, 7
    %v346 = vsub.s32 0, %v345
    %v347 = vrot.slane %v342, %v346
    %v348 = vlaneseq
    %v349 = vshrl.u32 %v348, 7
    %v350 = vsub.s32 1, %v349
    %v351 = vrot.slane %v342, %v350
    %v418 = vunpack.c.l.b16 %v278
    %v419 = vunpack.c.h.b16 %v278
    %v420 = vunpack.c.l.b16 %v279
    %v421 = vunpack.c.h.b16 %v279
    %v422 = vunpack.c.l.b16 %v280
    %v423 = vunpack.c.h.b16 %v280
    %v424 = vunpack.c.l.b16 %v281
    %v425 = vunpack.c.h.b16 %v281
    %v426 = vunpack.c.l.b16 %v282
    %v427 = vunpack.c.h.b16 %v282
    %v428 = vunpack.c.l.b16 %v283
    %v429 = vunpack.c.h.b16 %v283
    %v430 = vunpack.c.l.b16 %v284
    %v431 = vunpack.c.h.b16 %v284
    %v432 = vunpack.c.l.b16 %v285
    %v433 = vunpack.c.h.b16 %v285
    %v434 = vunpack.c.l.b16 %v286
    %v435 = vunpack.c.h.b16 %v286
    %v436 = vunpack.c.l.b16 %v287
    %v437 = vunpack.c.h.b16 %v287
    %v438 = vunpack.c.l.b16 %v288
    %v439 = vunpack.c.h.b16 %v288
    %v440 = vunpack.c.l.b16 %v289
    %v441 = vunpack.c.h.b16 %v289
    %v442 = vunpack.c.l.b16 %v290
    %v443 = vunpack.c.h.b16 %v290
    %v444 = vunpack.c.l.b16 %v291
    %v445 = vunpack.c.h.b16 %v291
    %v446 = vunpack.c.l.b16 %v292
    %v447 = vunpack.c.h.b16 %v292
    %v448 = vunpack.c.l.b16 %v293
    %v449 = vunpack.c.h.b16 %v293
    %v450 = vunpack.c.l.b16 %v294
    %v451 = vunpack.c.h.b16 %v294
    %v452 = vunpack.c.l.b16 %v295
    %v453 = vunpack.c.h.b16 %v295
    %v454 = vunpack.c.l.b16 %v296
    %v455 = vunpack.c.h.b16 %v296
    %v456 = vunpack.c.l.b16 %v297
    %v457 = vunpack.c.h.b16 %v297
    %v458 = vunpack.c.l.b16 %v298
    %v459 = vunpack.c.h.b16 %v298
    %v460 = vunpack.c.l.b16 %v299
    %v461 = vunpack.c.h.b16 %v299
    %v462 = vunpack.c.l.b16 %v300
    %v463 = vunpack.c.h.b16 %v300
    %v464 = vunpack.c.l.b16 %v301
    %v465 = vunpack.c.h.b16 %v301
    %v466 = vunpack.c.l.b16 %v302
    %v467 = vunpack.c.h.b16 %v302
    %v468 = vunpack.c.l.b16 %v303
    %v469 = vunpack.c.h.b16 %v303
    %v470 = vunpack.c.l.b16 %v304
    %v471 = vunpack.c.h.b16 %v304
    %v472 = vunpack.c.l.b16 %v305
    %v473 = vunpack.c.h.b16 %v305
    %v474 = vunpack.c.l.b16 %v306
    %v475 = vunpack.c.h.b16 %v306
    %v476 = vunpack.c.l.b16 %v307
    %v477 = vunpack.c.h.b16 %v307
    %v478 = vunpack.c.l.b16 %v308
    %v479 = vunpack.c.h.b16 %v308
    %v480 = vunpack.c.l.b16 %v309
    %v481 = vunpack.c.h.b16 %v309
    %v482 = vunpack.c.l.b16 %v310
    %v483 = vunpack.c.h.b16 %v310
    %v484 = vunpack.c.l.b16 %v311
    %v485 = vunpack.c.h.b16 %v311
    %v486 = vunpack.c.l.b16 %v312
    %v487 = vunpack.c.h.b16 %v312
    %v488 = vunpack.c.l.b16 %v313
    %v489 = vunpack.c.h.b16 %v313
    %v490 = vunpack.c.l.b16 %v314
    %v491 = vunpack.c.h.b16 %v314
    %v492 = vunpack.c.l.b16 %v315
    %v493 = vunpack.c.h.b16 %v315
    %v494 = vunpack.c.l.b16 %v316
    %v495 = vunpack.c.h.b16 %v316
    %v496 = vunpack.c.l.b16 %v317
    %v497 = vunpack.c.h.b16 %v317
    %v498 = vunpack.c.l.b16 %v318
    %v499 = vunpack.c.h.b16 %v318
    %v500 = vunpack.c.l.b16 %v319
    %v501 = vunpack.c.h.b16 %v319
    %v502 = vunpack.c.l.b16 %v320
    %v503 = vunpack.c.h.b16 %v320
    %v504 = vunpack.c.l.b16 %v321
    %v505 = vunpack.c.h.b16 %v321
    %v506 = vunpack.c.l.b16 %v322
    %v507 = vunpack.c.h.b16 %v322
    %v508 = vunpack.c.l.b16 %v323
    %v509 = vunpack.c.h.b16 %v323
    %v510 = vunpack.c.l.b16 %v324
    %v511 = vunpack.c.h.b16 %v324
    %v512 = vunpack.c.l.b16 %v325
    %v513 = vunpack.c.h.b16 %v325
    %v514 = vunpack.c.l.b16 %v326
    %v515 = vunpack.c.h.b16 %v326
    %v516 = vunpack.c.l.b16 %v327
    %v517 = vunpack.c.h.b16 %v327
    %v518 = vunpack.c.l.b16 %v328
    %v519 = vunpack.c.h.b16 %v328
    %v520 = vunpack.c.l.b16 %v329
    %v521 = vunpack.c.h.b16 %v329
    %v522 = vunpack.c.l.b16 %v330
    %v523 = vunpack.c.h.b16 %v330
    %v524 = vunpack.c.l.b16 %v331
    %v525 = vunpack.c.h.b16 %v331
    %v526 = vunpack.c.l.b16 %v332
    %v527 = vunpack.c.h.b16 %v332
    %v528 = vunpack.c.l.b16 %v333
    %v529 = vunpack.c.h.b16 %v333
    %v530 = vunpack.c.l.b16 %v334
    %v531 = vunpack.c.h.b16 %v334
    %v532 = vunpack.c.l.b16 %v335
    %v533 = vunpack.c.h.b16 %v335
    %v534 = vunpack.c.l.b16 %v336
    %v535 = vunpack.c.h.b16 %v336
    %v536 = vunpack.c.l.b16 %v337
    %v537 = vunpack.c.h.b16 %v337
    %v538 = vunpack.c.l.b16 %v338
    %v539 = vunpack.c.h.b16 %v338
    %v540 = vunpack.c.l.b16 %v339
    %v541 = vunpack.c.h.b16 %v339
    %v542 = vunpack.c.l.b16 %v340
    %v543 = vunpack.c.h.b16 %v340
    %v544 = vunpack.c.l.b16 %v341
    %v545 = vunpack.c.h.b16 %v341
    %v546 = vpack.c.b16 %v420, %v418
    %v547 = vpack.c.b16 %v421, %v419
    %v548 = vpack.c.b16 %v424, %v422
    %v549 = vpack.c.b16 %v425, %v423
    %v550 = vpack.c.b16 %v428, %v426
    %v551 = vpack.c.b16 %v429, %v427
    %v552 = vpack.c.b16 %v432, %v430
    %v553 = vpack.c.b16 %v433, %v431
    %v554 = vpack.c.b16 %v436, %v434
    %v555 = vpack.c.b16 %v437, %v435
    %v556 = vpack.c.b16 %v440, %v438
    %v557 = vpack.c.b16 %v441, %v439
    %v558 = vpack.c.b16 %v444, %v442
    %v559 = vpack.c.b16 %v445, %v443
    %v560 = vpack.c.b16 %v448, %v446
    %v561 = vpack.c.b16 %v449, %v447
    %v562 = vpack.c.b16 %v452, %v450
    %v563 = vpack.c.b16 %v453, %v451
    %v564 = vpack.c.b16 %v456, %v454
    %v565 = vpack.c.b16 %v457, %v455
    %v566 = vpack.c.b16 %v460, %v458
    %v567 = vpack.c.b16 %v461, %v459
    %v568 = vpack.c.b16 %v464, %v462
    %v569 = vpack.c.b16 %v465, %v463
    %v570 = vpack.c.b16 %v468, %v466
    %v571 = vpack.c.b16 %v469, %v467
    %v572 = vpack.c.b16 %v472, %v470
    %v573 = vpack.c.b16 %v473, %v471
    %v574 = vpack.c.b16 %v476, %v474
    %v575 = vpack.c.b16 %v477, %v475
    %v576 = vpack.c.b16 %v480, %v478
    %v577 = vpack.c.b16 %v481, %v479
    %v578 = vpack.c.b16 %v484, %v482
    %v579 = vpack.c.b16 %v485, %v483
    %v580 = vpack.c.b16 %v488, %v486
    %v581 = vpack.c.b16 %v489, %v487
    %v582 = vpack.c.b16 %v492, %v490
    %v583 = vpack.c.b16 %v493, %v491
    %v584 = vpack.c.b16 %v496, %v494
    %v585 = vpack.c.b16 %v497, %v495
    %v586 = vpack.c.b16 %v500, %v498
    %v587 = vpack.c.b16 %v501, %v499
    %v588 = vpack.c.b16 %v504, %v502
    %v589 = vpack.c.b16 %v505, %v503
    %v590 = vpack.c.b16 %v508, %v506
    %v591 = vpack.c.b16 %v509, %v507
    %v592 = vpack.c.b16 %v512, %v510
    %v593 = vpack.c.b16 %v513, %v511
    %v594 = vpack.c.b16 %v516, %v514
    %v595 = vpack.c.b16 %v517, %v515
    %v596 = vpack.c.b16 %v520, %v518
    %v597 = vpack.c.b16 %v521, %v519
    %v598 = vpack.c.b16 %v524, %v522
    %v599 = vpack.c.b16 %v525, %v523
    %v600 = vpack.c.b16 %v528, %v526
    %v601 = vpack.c.b16 %v529, %v527
    %v602 = vpack.c.b16 %v532, %v530
    %v603 = vpack.c.b16 %v533, %v531
    %v604 = vpack.c.b16 %v536, %v534
    %v605 = vpack.c.b16 %v537, %v535
    %v606 = vpack.c.b16 %v540, %v538
    %v607 = vpack.c.b16 %v541, %v539
    %v608 = vpack.c.b16 %v544, %v542
    %v609 = vpack.c.b16 %v545, %v543
    %674 = vmatprep.subr.bf16.mxu0 %v561
    %675 = vmatpush1.bf16.msra.mxu0 %v560
    %676 = vmatprep.subr.bf16.mxu0 %v559
    %677 = vmatpush1.bf16.msra.mxu0 %v558
    %678 = vmatprep.subr.bf16.mxu0 %v557
    %679 = vmatpush1.bf16.msra.mxu0 %v556
    %680 = vmatprep.subr.bf16.mxu0 %v555
    %681 = vmatpush1.bf16.msra.mxu0 %v554
    %682 = vmatprep.subr.bf16.mxu0 %v553
    %683 = vmatpush1.bf16.msra.mxu0 %v552
    %684 = vmatprep.subr.bf16.mxu0 %v551
    %685 = vmatpush1.bf16.msra.mxu0 %v550
    %686 = vmatprep.subr.bf16.mxu0 %v549
    %687 = vmatpush1.bf16.msra.mxu0 %v548
    %688 = vmatprep.subr.bf16.mxu0 %v547
    %689 = vmatpush1.bf16.msra.mxu0 %v546
    %690 = vmatprep.subr.bf16.mxu0 %v577
    %691 = vmatpush2.bf16.msra.mxu0 %v576
    %692 = vmatprep.subr.bf16.mxu0 %v575
    %693 = vmatpush2.bf16.msra.mxu0 %v574
    %694 = vmatprep.subr.bf16.mxu0 %v573
    %695 = vmatpush2.bf16.msra.mxu0 %v572
    %696 = vmatprep.subr.bf16.mxu0 %v571
    %697 = vmatpush2.bf16.msra.mxu0 %v570
    %698 = vmatprep.subr.bf16.mxu0 %v569
    %699 = vmatpush2.bf16.msra.mxu0 %v568
    %700 = vmatprep.subr.bf16.mxu0 %v567
    %701 = vmatpush2.bf16.msra.mxu0 %v566
    %702 = vmatprep.subr.bf16.mxu0 %v565
    %703 = vmatpush2.bf16.msra.mxu0 %v564
    %704 = vmatprep.subr.bf16.mxu0 %v563
    %705 = vmatpush2.bf16.msra.mxu0 %v562
    %706 = vmatprep.mubr.bf16.mxu0 %v275
    %707 = vmatmul.mubr.bf16.gmra.mxu0 %v274
    %v708 = vpop.f32.mrf.mxu0
    %v709 = vadd.f32 %v347, %v708
    %v710 = vpop.f32.mrf.mxu0
    %v711 = vadd.f32 %v351, %v710
    %v712 = vpop.f32.mrf.mxu0
    %v713 = vpop.f32.mrf.mxu0
    %714 = vdwg.mxu0
    %715 = vmatprep.subr.bf16.mxu0 %v593
    %716 = vmatpush1.bf16.msra.mxu0 %v592
    %717 = vmatprep.subr.bf16.mxu0 %v591
    %718 = vmatpush1.bf16.msra.mxu0 %v590
    %719 = vmatprep.subr.bf16.mxu0 %v589
    %720 = vmatpush1.bf16.msra.mxu0 %v588
    %721 = vmatprep.subr.bf16.mxu0 %v587
    %722 = vmatpush1.bf16.msra.mxu0 %v586
    %723 = vmatprep.subr.bf16.mxu0 %v585
    %724 = vmatpush1.bf16.msra.mxu0 %v584
    %725 = vmatprep.subr.bf16.mxu0 %v583
    %726 = vmatpush1.bf16.msra.mxu0 %v582
    %727 = vmatprep.subr.bf16.mxu0 %v581
    %728 = vmatpush1.bf16.msra.mxu0 %v580
    %729 = vmatprep.subr.bf16.mxu0 %v579
    %730 = vmatpush1.bf16.msra.mxu0 %v578
    %731 = vmatprep.subr.bf16.mxu0 %v609
    %732 = vmatpush2.bf16.msra.mxu0 %v608
    %733 = vmatprep.subr.bf16.mxu0 %v607
    %734 = vmatpush2.bf16.msra.mxu0 %v606
    %735 = vmatprep.subr.bf16.mxu0 %v605
    %736 = vmatpush2.bf16.msra.mxu0 %v604
    %737 = vmatprep.subr.bf16.mxu0 %v603
    %738 = vmatpush2.bf16.msra.mxu0 %v602
    %739 = vmatprep.subr.bf16.mxu0 %v601
    %740 = vmatpush2.bf16.msra.mxu0 %v600
    %741 = vmatprep.subr.bf16.mxu0 %v599
    %742 = vmatpush2.bf16.msra.mxu0 %v598
    %743 = vmatprep.subr.bf16.mxu0 %v597
    %744 = vmatpush2.bf16.msra.mxu0 %v596
    %745 = vmatprep.subr.bf16.mxu0 %v595
    %746 = vmatpush2.bf16.msra.mxu0 %v594
    %747 = vmatprep.mubr.bf16.mxu0 %v277
    %748 = vmatmul.mubr.bf16.gmra.mxu0 %v276
    %v749 = vpop.f32.mrf.mxu0
    %v750 = vadd.f32 %v709, %v749
    %v751 = vpop.f32.mrf.mxu0
    %v752 = vadd.f32 %v711, %v751
    %v753 = vpop.f32.mrf.mxu0
    %v754 = vpop.f32.mrf.mxu0
    %755 = vdwg.mxu0
    %v756 = vmax.f32 %v750, 0.0
    %v757 = vmax.f32 %v752, 0.0
    %v758 = vpack.c.bf16 %v756, %v756
    %v759 = vpack.c.bf16 %v757, %v757
    %v760 = vld [vmem:[#allocation10] sm:$0xf]
    %v761 = vld [vmem:[#allocation10 + $0x4] sm:$0xf]
    %v762 = vld [vmem:[#allocation10 + $0x8] sm:$0xf]
    %v763 = vld [vmem:[#allocation10 + $0xc] sm:$0xf]
    %v764 = vld [vmem:[#allocation10 + $0x10] sm:$0xf]
    %v765 = vld [vmem:[#allocation10 + $0x14] sm:$0xf]
    %v766 = vld [vmem:[#allocation10 + $0x18] sm:$0xf]
    %v767 = vld [vmem:[#allocation10 + $0x1c] sm:$0xf]
    %v768 = vld [vmem:[#allocation10 + $0x20] sm:$0xf]
    %v769 = vld [vmem:[#allocation10 + $0x24] sm:$0xf]
    %v770 = vld [vmem:[#allocation10 + $0x28] sm:$0xf]
    %v771 = vld [vmem:[#allocation10 + $0x2c] sm:$0xf]
    %v772 = vld [vmem:[#allocation10 + $0x30] sm:$0xf]
    %v773 = vld [vmem:[#allocation10 + $0x34] sm:$0xf]
    %v774 = vld [vmem:[#allocation10 + $0x38] sm:$0xf]
    %v775 = vld [vmem:[#allocation10 + $0x3c] sm:$0xf]
    %v776 = vld [vmem:[#allocation10 + $0x40] sm:$0xf]
    %v777 = vld [vmem:[#allocation10 + $0x44] sm:$0xf]
    %v778 = vld [vmem:[#allocation10 + $0x48] sm:$0xf]
    %v779 = vld [vmem:[#allocation10 + $0x4c] sm:$0xf]
    %v780 = vld [vmem:[#allocation10 + $0x50] sm:$0xf]
    %v781 = vld [vmem:[#allocation10 + $0x54] sm:$0xf]
    %v782 = vld [vmem:[#allocation10 + $0x58] sm:$0xf]
    %v783 = vld [vmem:[#allocation10 + $0x5c] sm:$0xf]
    %v784 = vld [vmem:[#allocation10 + $0x60] sm:$0xf]
    %v785 = vld [vmem:[#allocation10 + $0x64] sm:$0xf]
    %v786 = vld [vmem:[#allocation10 + $0x68] sm:$0xf]
    %v787 = vld [vmem:[#allocation10 + $0x6c] sm:$0xf]
    %v788 = vld [vmem:[#allocation10 + $0x70] sm:$0xf]
    %v789 = vld [vmem:[#allocation10 + $0x74] sm:$0xf]
    %v790 = vld [vmem:[#allocation10 + $0x78] sm:$0xf]
    %v791 = vld [vmem:[#allocation10 + $0x7c] sm:$0xf]
    %v792 = vld [vmem:[%s6] sm:$0x1]
    %v794 = vlaneseq
    %v795 = vshrl.u32 %v794, 7
    %v796 = vsub.s32 0, %v795
    %v797 = vrot.slane %v792, %v796
    %v831 = vunpack.c.l.b16 %v760
    %v832 = vunpack.c.l.b16 %v761
    %v833 = vunpack.c.l.b16 %v762
    %v834 = vunpack.c.l.b16 %v763
    %v835 = vunpack.c.l.b16 %v764
    %v836 = vunpack.c.l.b16 %v765
    %v837 = vunpack.c.l.b16 %v766
    %v838 = vunpack.c.l.b16 %v767
    %v839 = vunpack.c.l.b16 %v768
    %v840 = vunpack.c.l.b16 %v769
    %v841 = vunpack.c.l.b16 %v770
    %v842 = vunpack.c.l.b16 %v771
    %v843 = vunpack.c.l.b16 %v772
    %v844 = vunpack.c.l.b16 %v773
    %v845 = vunpack.c.l.b16 %v774
    %v846 = vunpack.c.l.b16 %v775
    %v847 = vunpack.c.l.b16 %v776
    %v848 = vunpack.c.l.b16 %v777
    %v849 = vunpack.c.l.b16 %v778
    %v850 = vunpack.c.l.b16 %v779
    %v851 = vunpack.c.l.b16 %v780
    %v852 = vunpack.c.l.b16 %v781
    %v853 = vunpack.c.l.b16 %v782
    %v854 = vunpack.c.l.b16 %v783
    %v855 = vunpack.c.l.b16 %v784
    %v856 = vunpack.c.l.b16 %v785
    %v857 = vunpack.c.l.b16 %v786
    %v858 = vunpack.c.l.b16 %v787
    %v859 = vunpack.c.l.b16 %v788
    %v860 = vunpack.c.l.b16 %v789
    %v861 = vunpack.c.l.b16 %v790
    %v862 = vunpack.c.l.b16 %v791
    %v863 = vpack.c.b16 %v832, %v831
    %v864 = vpack.c.b16 %v834, %v833
    %v865 = vpack.c.b16 %v836, %v835
    %v866 = vpack.c.b16 %v838, %v837
    %v867 = vpack.c.b16 %v840, %v839
    %v868 = vpack.c.b16 %v842, %v841
    %v869 = vpack.c.b16 %v844, %v843
    %v870 = vpack.c.b16 %v846, %v845
    %v871 = vpack.c.b16 %v848, %v847
    %v872 = vpack.c.b16 %v850, %v849
    %v873 = vpack.c.b16 %v852, %v851
    %v874 = vpack.c.b16 %v854, %v853
    %v875 = vpack.c.b16 %v856, %v855
    %v876 = vpack.c.b16 %v858, %v857
    %v877 = vpack.c.b16 %v860, %v859
    %v878 = vpack.c.b16 %v862, %v861
    %895 = vmatprep.subr.bf16.mxu0 0
    %896 = vmatpush1.bf16.msra.mxu0 %v870
    %897 = vmatprep.subr.bf16.mxu0 0
    %898 = vmatpush1.bf16.msra.mxu0 %v869
    %899 = vmatprep.subr.bf16.mxu0 0
    %900 = vmatpush1.bf16.msra.mxu0 %v868
    %901 = vmatprep.subr.bf16.mxu0 0
    %902 = vmatpush1.bf16.msra.mxu0 %v867
    %903 = vmatprep.subr.bf16.mxu0 0
    %904 = vmatpush1.bf16.msra.mxu0 %v866
    %905 = vmatprep.subr.bf16.mxu0 0
    %906 = vmatpush1.bf16.msra.mxu0 %v865
    %907 = vmatprep.subr.bf16.mxu0 0
    %908 = vmatpush1.bf16.msra.mxu0 %v864
    %909 = vmatprep.subr.bf16.mxu0 0
    %910 = vmatpush1.bf16.msra.mxu0 %v863
    %911 = vmatprep.subr.bf16.mxu0 0
    %912 = vmatpush2.bf16.msra.mxu0 %v878
    %913 = vmatprep.subr.bf16.mxu0 0
    %914 = vmatpush2.bf16.msra.mxu0 %v877
    %915 = vmatprep.subr.bf16.mxu0 0
    %916 = vmatpush2.bf16.msra.mxu0 %v876
    %917 = vmatprep.subr.bf16.mxu0 0
    %918 = vmatpush2.bf16.msra.mxu0 %v875
    %919 = vmatprep.subr.bf16.mxu0 0
    %920 = vmatpush2.bf16.msra.mxu0 %v874
    %921 = vmatprep.subr.bf16.mxu0 0
    %922 = vmatpush2.bf16.msra.mxu0 %v873
    %923 = vmatprep.subr.bf16.mxu0 0
    %924 = vmatpush2.bf16.msra.mxu0 %v872
    %925 = vmatprep.subr.bf16.mxu0 0
    %926 = vmatpush2.bf16.msra.mxu0 %v871
    %927 = vmatprep.mubr.bf16.mxu0 %v759
    %928 = vmatmul.mubr.bf16.gmra.mxu0 %v758
    %v929 = vpop.f32.mrf.mxu0
    %v930 = vadd.f32 %v797, %v929
    %v931 = vpop.f32.mrf.mxu0
    %v932 = vpop.f32.mrf.mxu0
    %v933 = vpop.f32.mrf.mxu0
    %934 = vdwg.mxu0
    %v935 = vmax.f32 %v930, 0.0
    %v936 = vpack.c.bf16 %v935, %v935
    %v937 = vld [vmem:[#allocation11] sm:$0xf]
    %v938 = vld [vmem:[#allocation11 + $0x4] sm:$0xf]
    %v939 = vld [vmem:[#allocation11 + $0x8] sm:$0xf]
    %v940 = vld [vmem:[#allocation11 + $0xc] sm:$0xf]
    %v941 = vld [vmem:[#allocation11 + $0x10] sm:$0xf]
    %v942 = vld [vmem:[#allocation11 + $0x14] sm:$0xf]
    %v943 = vld [vmem:[#allocation11 + $0x18] sm:$0xf]
    %v944 = vld [vmem:[#allocation11 + $0x1c] sm:$0xf]
    %v945 = vld [vmem:[#allocation11 + $0x20] sm:$0xf]
    %v946 = vld [vmem:[#allocation11 + $0x24] sm:$0xf]
    %v947 = vld [vmem:[#allocation11 + $0x28] sm:$0xf]
    %v948 = vld [vmem:[#allocation11 + $0x2c] sm:$0xf]
    %v949 = vld [vmem:[#allocation11 + $0x30] sm:$0xf]
    %v950 = vld [vmem:[#allocation11 + $0x34] sm:$0xf]
    %v951 = vld [vmem:[#allocation11 + $0x38] sm:$0xf]
    %v952 = vld [vmem:[#allocation11 + $0x3c] sm:$0xf]
    %v953 = vld [vmem:[%s8] sm:$0x1]
    %v955 = vlaneseq
    %v956 = vshrl.u32 %v955, 7
    %v957 = vsub.s32 0, %v956
    %v958 = vrot.slane %v953, %v957
    %v976 = vunpack.c.l.b16 %v937
    %v977 = vunpack.c.l.b16 %v938
    %v978 = vunpack.c.l.b16 %v939
    %v979 = vunpack.c.l.b16 %v940
    %v980 = vunpack.c.l.b16 %v941
    %v981 = vunpack.c.l.b16 %v942
    %v982 = vunpack.c.l.b16 %v943
    %v983 = vunpack.c.l.b16 %v944
    %v984 = vunpack.c.l.b16 %v945
    %v985 = vunpack.c.l.b16 %v946
    %v986 = vunpack.c.l.b16 %v947
    %v987 = vunpack.c.l.b16 %v948
    %v988 = vunpack.c.l.b16 %v949
    %v989 = vunpack.c.l.b16 %v950
    %v990 = vunpack.c.l.b16 %v951
    %v991 = vunpack.c.l.b16 %v952
    %v992 = vpack.c.b16 %v977, %v976
    %v993 = vpack.c.b16 %v979, %v978
    %v994 = vpack.c.b16 %v981, %v980
    %v995 = vpack.c.b16 %v983, %v982
    %v996 = vpack.c.b16 %v985, %v984
    %v997 = vpack.c.b16 %v987, %v986
    %v998 = vpack.c.b16 %v989, %v988
    %v999 = vpack.c.b16 %v991, %v990
    %1008 = vmatprep.subr.bf16.mxu0 0
    %1009 = vmatpush1.bf16.msra.mxu0 %v999
    %1010 = vmatprep.subr.bf16.mxu0 0
    %1011 = vmatpush1.bf16.msra.mxu0 %v998
    %1012 = vmatprep.subr.bf16.mxu0 0
    %1013 = vmatpush1.bf16.msra.mxu0 %v997
    %1014 = vmatprep.subr.bf16.mxu0 0
    %1015 = vmatpush1.bf16.msra.mxu0 %v996
    %1016 = vmatprep.subr.bf16.mxu0 0
    %1017 = vmatpush1.bf16.msra.mxu0 %v995
    %1018 = vmatprep.subr.bf16.mxu0 0
    %1019 = vmatpush1.bf16.msra.mxu0 %v994
    %1020 = vmatprep.subr.bf16.mxu0 0
    %1021 = vmatpush1.bf16.msra.mxu0 %v993
    %1022 = vmatprep.subr.bf16.mxu0 0
    %1023 = vmatpush1.bf16.msra.mxu0 %v992
    %1024 = vmatprep.subr.bf16.mxu0 0
    %1025 = vmatpush2.bf16.msra.mxu0 0
    %1026 = vmatprep.subr.bf16.mxu0 0
    %1027 = vmatpush2.bf16.msra.mxu0 0
    %1028 = vmatprep.subr.bf16.mxu0 0
    %1029 = vmatpush2.bf16.msra.mxu0 0
    %1030 = vmatprep.subr.bf16.mxu0 0
    %1031 = vmatpush2.bf16.msra.mxu0 0
    %1032 = vmatprep.subr.bf16.mxu0 0
    %1033 = vmatpush2.bf16.msra.mxu0 0
    %1034 = vmatprep.subr.bf16.mxu0 0
    %1035 = vmatpush2.bf16.msra.mxu0 0
    %1036 = vmatprep.subr.bf16.mxu0 0
    %1037 = vmatpush2.bf16.msra.mxu0 0
    %1038 = vmatprep.subr.bf16.mxu0 0
    %1039 = vmatpush2.bf16.msra.mxu0 0
    %1040 = vmatprep.mubr.bf16.mxu0 0
    %1041 = vmatmul.mubr.bf16.gmra.mxu0 %v936
    %v1042 = vpop.f32.mrf.mxu0
    %v1043 = vadd.f32 %v958, %v1042
    %v1044 = vpop.f32.mrf.mxu0
    %v1045 = vpop.f32.mrf.mxu0
    %v1046 = vpop.f32.mrf.mxu0
    %1047 = vdwg.mxu0
    %1048 = vst [vmem:[#allocation13] sm:$0xff] %v1043
    // Predicated region
    $region62: #{tpu_custom_call.1} parent=1 // pred_check
      _
    $region63: #{tpu_custom_call.1} parent=1 // pred_check_branch
      %1050 = sbr.rel (0) target = $region65
    $region64: #{tpu_custom_call.1} parent=1 // pred_region
      %s1052 = ssub.s32 128, 128
      %1053 = vsyncadd [#allocation4], %s1052
      %s1055 = sshll.u32 [#allocation13], 4
      %s1056 = int_to_ptr.vmem [resolvable:$true] %s1055
      %1058 = dma.vmem_to_hbm [thread:$0]  %s1056, 128, %s9, [#allocation4]
    $region65: #{tpu_custom_call.1} parent=1 // pred_fallthru
      _
    // Predicated region
    $region66: #{tpu_custom_call.1} parent=1 // pred_check
      _
    $region67: #{tpu_custom_call.1} parent=1 // pred_check_branch
      %1060 = sbr.rel (0) target = $region69
    $region68: #{tpu_custom_call.1} parent=1 // pred_region
      %1061 = dma.done [#allocation4], 128
    $region69: #{tpu_custom_call.1} parent=1 // pred_fallthru
      _
    %1062 = vsyncpa [#allocation3], 1
    %1063 = vsyncpa [#allocation6], 1
    %1064 = vsyncpa [#allocation9], 1
    %1065 = vsyncpa [#allocation12], 1
    %1066 = vsyncpa [#allocation4], 1

</llo_original>
